<compile_context>
chip_gen: v6e
topology: v6e:2x2x1
jax: 0.10.0
libtpu: 0.0.40
codegen_flags: <defaults>
</compile_context>

<pallas_src>
import jax
import jax.numpy as jnp
from jax.experimental import pallas as pl
from jax.experimental.pallas import tpu as pltpu

_LANE = 128   # f32 lane width
_SUB = 8      # f32 sublane count


def _round_up(x, m):
    return ((x + m - 1) // m) * m


def _net_kernel(x_ref, w1_ref, b1_ref, w2_ref, b2_ref, o_ref):
    # x tile: [TB, K] f32; w1/w2 are bf16 (cast once outside); accumulate in f32 on MXU.
    x = x_ref[...].astype(jnp.bfloat16)
    h = jnp.dot(x, w1_ref[...], preferred_element_type=jnp.float32) + b1_ref[...]
    h = jnp.maximum(h, 0.0)                                   # ReLU in f32 (v5e-safe)
    z = jnp.dot(h.astype(jnp.bfloat16), w2_ref[...],
                preferred_element_type=jnp.float32) + b2_ref[...]
    # sigmoid(z) = 1 / (1 + exp(-z)): exp -> EUP, approx reciprocal -> cheap vrcp.
    o_ref[...] = pl.reciprocal(1.0 + jnp.exp(-z), approx=True)


def net_forward(x, w1, b1, w2, b2, *, tb=None):
    """Forward pass of Net: sigmoid(relu(x @ W1 + b1) @ W2 + b2).

    x : [B, N_STATES] float32
    w1: [N_STATES, 2*N_STATES], b1: [1, 2*N_STATES]   (already transposed vs torch)
    w2: [2*N_STATES, N_ACTIONS], b2: [1, N_ACTIONS]
    Returns [B, N_ACTIONS] float32.
    """
    B, K = x.shape
    H = w1.shape[1]
    A = w2.shape[1]

    Hp = _round_up(H, _LANE)          # lane-dense hidden
    Ap = _round_up(A, _LANE)          # lane-dense output

    # Batch tile: multiple of 8 sublanes, capped so big batches still pipeline nicely.
    if tb is None:
        tb = min(512, _round_up(B, _SUB))
    tb = _round_up(tb, _SUB)
    Bp = _round_up(B, tb)

    # One-time padding / bf16 cast (zero pads keep the real lanes exact).
    x_p = jnp.zeros((Bp, K), jnp.float32).at[:B, :].set(x.astype(jnp.float32))
    w1_p = jnp.zeros((K, Hp), jnp.bfloat16).at[:, :H].set(w1.astype(jnp.bfloat16))
    b1_p = jnp.zeros((1, Hp), jnp.float32).at[:, :H].set(b1.reshape(1, H).astype(jnp.float32))
    w2_p = jnp.zeros((Hp, Ap), jnp.bfloat16).at[:H, :A].set(w2.astype(jnp.bfloat16))
    b2_p = jnp.zeros((1, Ap), jnp.float32).at[:, :A].set(b2.reshape(1, A).astype(jnp.float32))

    out_padded = pl.pallas_call(
        _net_kernel,
        out_shape=jax.ShapeDtypeStruct((Bp, Ap), jnp.float32),
        grid_spec=pltpu.PrefetchScalarGridSpec(
            num_scalar_prefetch=0,
            grid=(Bp // tb,),
            in_specs=[
                pl.BlockSpec((tb, K), lambda i: (i, 0)),    # x tiles stream over batch
                pl.BlockSpec((K, Hp), lambda i: (0, 0)),    # weights stay VMEM-resident
                pl.BlockSpec((1, Hp), lambda i: (0, 0)),
                pl.BlockSpec((Hp, Ap), lambda i: (0, 0)),
                pl.BlockSpec((1, Ap), lambda i: (0, 0)),
            ],
            out_specs=pl.BlockSpec((tb, Ap), lambda i: (i, 0)),
        ),
        compiler_params=pltpu.CompilerParams(
            dimension_semantics=("parallel",),              # shard batch across TCs (v7x)
        ),
    )(x_p, w1_p, b1_p, w2_p, b2_p)

    # Drop batch padding and the sigmoid(0)=0.5 pad lanes before anything downstream.
    return out_padded[:B, :A]


def init_params(key, n_states, n_actions):
    """Deterministic init mirroring the module's __init__ shapes.

    PyTorch stores Linear weights as [out, in]; we keep them transposed
    ([in, out]) so the kernel is a plain x @ W.
    """
    k1, k2, k3, k4 = jax.random.split(key, 4)
    hidden = 2 * n_states
    # fc1.weight.data.normal_(0, 0.1) -> N(0, 0.1); bias keeps default small init.
    w1 = 0.1 * jax.random.normal(k1, (n_states, hidden), jnp.float32)
    b1 = (jax.random.uniform(k2, (1, hidden), jnp.float32) - 0.5) * (2.0 / jnp.sqrt(n_states))
    w2 = 0.1 * jax.random.normal(k3, (hidden, n_actions), jnp.float32)
    b2 = (jax.random.uniform(k4, (1, n_actions), jnp.float32) - 0.5) * (2.0 / jnp.sqrt(hidden))
    return w1, b1, w2, b2


def _reference(x, w1, b1, w2, b2):
    # Pure-JAX reference with the same bf16 matmul-operand casting the kernel uses.
    h = jnp.dot(x.astype(jnp.bfloat16), w1.astype(jnp.bfloat16),
                preferred_element_type=jnp.float32) + b1
    h = jnp.maximum(h, 0.0)
    z = jnp.dot(h.astype(jnp.bfloat16), w2.astype(jnp.bfloat16),
                preferred_element_type=jnp.float32) + b2
    return jax.nn.sigmoid(z)


if __name__ == "__main__":
    N_STATES = 32
    N_ACTIONS = 8
    BATCH = 4

    key = jax.random.PRNGKey(0)
    kx, kp = jax.random.split(key)
    x = jax.random.normal(kx, (BATCH, N_STATES), jnp.float32)
    w1, b1, w2, b2 = init_params(kp, N_STATES, N_ACTIONS)

    fwd = jax.jit(net_forward)
    out = jax.block_until_ready(fwd(x, w1, b1, w2, b2))

    ref = _reference(x, w1, b1, w2, b2)
    assert out.shape == (BATCH, N_ACTIONS)
    # bf16 MXU operands + approx reciprocal -> slightly looser tolerance than pure f32.
    assert jnp.allclose(out, ref, atol=5e-3, rtol=5e-3), float(jnp.max(jnp.abs(out - ref)))

    print("KERNEL_OK")
</pallas_src>

<mosaic_0001>
module attributes {stable_mosaic.version = 11 : i64} {
  func.func @_net_kernel(%arg0: i32, %arg1: memref<8x32xf32, #tpu.memory_space<vmem>>, %arg2: memref<32x128xbf16, #tpu.memory_space<vmem>>, %arg3: memref<1x128xf32, #tpu.memory_space<vmem>>, %arg4: memref<128x128xbf16, #tpu.memory_space<vmem>>, %arg5: memref<1x128xf32, #tpu.memory_space<vmem>>, %arg6: memref<8x128xf32, #tpu.memory_space<vmem>>) attributes {dimension_semantics = [#tpu.dimension_semantics<parallel>], iteration_bounds = array<i64: 1>, scalar_prefetch = 0 : i64, scratch_operands = 0 : i64, tpu.core_type = #tpu.core_type<tc>, window_params = [{transform_indices = @transform_0, window_bounds = array<i64: 8, 32>}, {pipeline_mode = #tpu.pipeline_mode<synchronous>, transform_indices = @transform_1, window_bounds = array<i64: 32, 128>}, {pipeline_mode = #tpu.pipeline_mode<synchronous>, transform_indices = @transform_2, window_bounds = array<i64: 1, 128>}, {pipeline_mode = #tpu.pipeline_mode<synchronous>, transform_indices = @transform_3, window_bounds = array<i64: 128, 128>}, {pipeline_mode = #tpu.pipeline_mode<synchronous>, transform_indices = @transform_4, window_bounds = array<i64: 1, 128>}, {transform_indices = @transform_5, window_bounds = array<i64: 8, 128>}]} {
    %c0 = arith.constant 0 : index
    %c0_0 = arith.constant 0 : index
    %0 = vector.load %arg1[%c0, %c0_0] : memref<8x32xf32, #tpu.memory_space<vmem>>, vector<8x32xf32>
    %1 = arith.truncf %0 : vector<8x32xf32> to vector<8x32xbf16>
    %c0_1 = arith.constant 0 : index
    %c0_2 = arith.constant 0 : index
    %2 = vector.load %arg2[%c0_1, %c0_2] : memref<32x128xbf16, #tpu.memory_space<vmem>>, vector<32x128xbf16>
    %cst = arith.constant dense<0.000000e+00> : vector<8x128xf32>
    %3 = tpu.matmul %1, %2, %cst {dimension_numbers = #tpu.dot_dimension_numbers<[1], [0], [0], [1], [0, 0, 1, 1], [], []>} : vector<8x32xbf16>, vector<32x128xbf16>, vector<8x128xf32> -> vector<8x128xf32>
    %c0_3 = arith.constant 0 : index
    %c0_4 = arith.constant 0 : index
    %4 = vector.load %arg3[%c0_3, %c0_4] : memref<1x128xf32, #tpu.memory_space<vmem>>, vector<1x128xf32>
    %5 = vector.broadcast %4 : vector<1x128xf32> to vector<8x128xf32>
    %6 = arith.addf %3, %5 : vector<8x128xf32>
    %cst_5 = arith.constant 0.000000e+00 : f32
    %7 = vector.broadcast %cst_5 : f32 to vector<8x128xf32>
    %8 = arith.maximumf %6, %7 : vector<8x128xf32>
    %9 = arith.truncf %8 : vector<8x128xf32> to vector<8x128xbf16>
    %c0_6 = arith.constant 0 : index
    %c0_7 = arith.constant 0 : index
    %10 = vector.load %arg4[%c0_6, %c0_7] : memref<128x128xbf16, #tpu.memory_space<vmem>>, vector<128x128xbf16>
    %cst_8 = arith.constant dense<0.000000e+00> : vector<8x128xf32>
    %11 = tpu.matmul %9, %10, %cst_8 {dimension_numbers = #tpu.dot_dimension_numbers<[1], [0], [0], [1], [0, 0, 1, 1], [], []>} : vector<8x128xbf16>, vector<128x128xbf16>, vector<8x128xf32> -> vector<8x128xf32>
    %c0_9 = arith.constant 0 : index
    %c0_10 = arith.constant 0 : index
    %12 = vector.load %arg5[%c0_9, %c0_10] : memref<1x128xf32, #tpu.memory_space<vmem>>, vector<1x128xf32>
    %13 = vector.broadcast %12 : vector<1x128xf32> to vector<8x128xf32>
    %14 = arith.addf %11, %13 : vector<8x128xf32>
    %cst_11 = arith.constant 0.000000e+00 : f32
    %15 = vector.broadcast %cst_11 : f32 to vector<8x128xf32>
    %16 = arith.subf %15, %14 : vector<8x128xf32>
    %17 = math.exp %16 : vector<8x128xf32>
    %cst_12 = arith.constant 1.000000e+00 : f32
    %18 = vector.broadcast %cst_12 : f32 to vector<8x128xf32>
    %19 = arith.addf %18, %17 : vector<8x128xf32>
    %20 = tpu.reciprocal %19 {approx = true} : vector<8x128xf32> -> vector<8x128xf32>
    %c0_13 = arith.constant 0 : index
    %c0_14 = arith.constant 0 : index
    %21 = vector.load %arg6[%c0_13, %c0_14] : memref<8x128xf32, #tpu.memory_space<vmem>>, vector<8x128xf32>
    tpu.vector_store %arg6[%c0_13, %c0_14], %20 {strides = array<i32>} : memref<8x128xf32, #tpu.memory_space<vmem>>, vector<8x128xf32>,
    return
  }
  func.func @transform_0(%arg0: i32) -> (i32, i32) {
    %c0_i32 = arith.constant 0 : i32
    %c0_i32_0 = arith.constant 0 : i32
    return %arg0, %c0_i32 : i32, i32
  }
  func.func @transform_1(%arg0: i32) -> (i32, i32) {
    %c0_i32 = arith.constant 0 : i32
    %c0_i32_0 = arith.constant 0 : i32
    %c0_i32_1 = arith.constant 0 : i32
    return %c0_i32, %c0_i32_0 : i32, i32
  }
  func.func @transform_2(%arg0: i32) -> (i32, i32) {
    %c0_i32 = arith.constant 0 : i32
    %c0_i32_0 = arith.constant 0 : i32
    %c0_i32_1 = arith.constant 0 : i32
    return %c0_i32, %c0_i32_0 : i32, i32
  }
  func.func @transform_3(%arg0: i32) -> (i32, i32) {
    %c0_i32 = arith.constant 0 : i32
    %c0_i32_0 = arith.constant 0 : i32
    %c0_i32_1 = arith.constant 0 : i32
    return %c0_i32, %c0_i32_0 : i32, i32
  }
  func.func @transform_4(%arg0: i32) -> (i32, i32) {
    %c0_i32 = arith.constant 0 : i32
    %c0_i32_0 = arith.constant 0 : i32
    %c0_i32_1 = arith.constant 0 : i32
    return %c0_i32, %c0_i32_0 : i32, i32
  }
  func.func @transform_5(%arg0: i32) -> (i32, i32) {
    %c0_i32 = arith.constant 0 : i32
    %c0_i32_0 = arith.constant 0 : i32
    return %arg0, %c0_i32 : i32, i32
  }
}

</mosaic_0001>

<llo_original>
// kernel: net_forward.1
$region0: #{net_forward.1}
  #allocation0 [shape = 'u32[]', space=smem, size = 0x4, offset = 0x4, fixed_abs, tag = 'smem constant byte address 0x4 - core index']
  #allocation1 [shape = 'u32[144,128]{1,0:T(1,128)}', space=vmem, size = 0x12000, scoped, tag = 'internal scratch']
  %s0 = inlined_call_operand.vmem [shape: f32[8,32], index: 0, kind: input, shape index: {}]
  %s1 = inlined_call_operand.vmem [shape: bf16[32,128], index: 1, kind: input, shape index: {}]
  %s2 = inlined_call_operand.vmem [shape: f32[1,128], index: 2, kind: input, shape index: {}]
  %s3 = inlined_call_operand.vmem [shape: bf16[128,128], index: 3, kind: input, shape index: {}]
  %s4 = inlined_call_operand.vmem [shape: f32[1,128], index: 4, kind: input, shape index: {}]
  %s5 = inlined_call_operand.vmem [shape: f32[8,128], index: 5, kind: output, shape index: {}]
  %s6 = sld [smem:[#allocation0]]
  $region30: #{net_forward.1} parent=0
    _
  %s8 = ssub.s32 1, %s6
  %s9 = scalar_select 0, %s8, %s6
  // Predicated region
  $region2: #{net_forward.1} parent=0 // pred_check
    _
  $region3: #{net_forward.1} parent=0 // pred_check_branch
    %11 = sbr.rel (0) target = $region5
  $region4: #{net_forward.1} parent=0 // pred_region
    _
  $region5: #{net_forward.1} parent=0 // pred_fallthru
    _
  // Predicated region
  $region6: #{net_forward.1} parent=0 // pred_check
    _
  $region7: #{net_forward.1} parent=0 // pred_check_branch
    %13 = sbr.rel (0) target = $region9
  $region8: #{net_forward.1} parent=0 // pred_region
    _
  $region9: #{net_forward.1} parent=0 // pred_fallthru
    _
  // Predicated region
  $region10: #{net_forward.1} parent=0 // pred_check
    _
  $region11: #{net_forward.1} parent=0 // pred_check_branch
    %15 = sbr.rel (0) target = $region13
  $region12: #{net_forward.1} parent=0 // pred_region
    _
  $region13: #{net_forward.1} parent=0 // pred_fallthru
    _
  // Predicated region
  $region14: #{net_forward.1} parent=0 // pred_check
    _
  $region15: #{net_forward.1} parent=0 // pred_check_branch
    %17 = sbr.rel (0) target = $region17
  $region16: #{net_forward.1} parent=0 // pred_region
    _
  $region17: #{net_forward.1} parent=0 // pred_fallthru
    _
  // Predicated region
  $region18: #{net_forward.1} parent=0 // pred_check
    _
  $region19: #{net_forward.1} parent=0 // pred_check_branch
    %19 = sbr.rel (0) target = $region21
  $region20: #{net_forward.1} parent=0 // pred_region
    _
  $region21: #{net_forward.1} parent=0 // pred_fallthru
    _
  %v21 = vld [vmem:[%s0] sm:$0xff]
  %v22 = vpack.c.bf16 %v21, %v21
  %v23 = vld [vmem:[%s1] sm:$0xf]
  %v24 = vld [vmem:[%s1 + $0x4] sm:$0xf]
  %v25 = vld [vmem:[%s1 + $0x8] sm:$0xf]
  %v26 = vld [vmem:[%s1 + $0xc] sm:$0xf]
  %v27 = vld [vmem:[%s2] sm:$0x1]
  %v29 = vlaneseq
  %v30 = vshrl.u32 %v29, 7
  %v31 = vsub.s32 0, %v30
  %v32 = vrot.slane %v27, %v31
  %v38 = vunpack.c.l.b16 %v23
  %v39 = vunpack.c.l.b16 %v24
  %v40 = vunpack.c.l.b16 %v25
  %v41 = vunpack.c.l.b16 %v26
  %v42 = vpack.c.b16 %v39, %v38
  %v43 = vpack.c.b16 %v41, %v40
  %vm46 = vcmask 261120
  %v48 = vsel %vm46, %v22, 0
  %50 = vmatprep.subr.bf16.mxu0 0
  %51 = vmatpush1.bf16.msra.mxu0 0
  %52 = vmatprep.subr.bf16.mxu0 0
  %53 = vmatpush1.bf16.msra.mxu0 0
  %54 = vmatprep.subr.bf16.mxu0 0
  %55 = vmatpush1.bf16.msra.mxu0 0
  %56 = vmatprep.subr.bf16.mxu0 0
  %57 = vmatpush1.bf16.msra.mxu0 0
  %58 = vmatprep.subr.bf16.mxu0 0
  %59 = vmatpush1.bf16.msra.mxu0 0
  %60 = vmatprep.subr.bf16.mxu0 0
  %61 = vmatpush1.bf16.msra.mxu0 0
  %62 = vmatprep.subr.bf16.mxu0 0
  %63 = vmatpush1.bf16.msra.mxu0 %v43
  %64 = vmatprep.subr.bf16.mxu0 0
  %65 = vmatpush1.bf16.msra.mxu0 %v42
  %66 = vmatprep.subr.bf16.mxu0 0
  %67 = vmatpush2.bf16.msra.mxu0 0
  %68 = vmatprep.subr.bf16.mxu0 0
  %69 = vmatpush2.bf16.msra.mxu0 0
  %70 = vmatprep.subr.bf16.mxu0 0
  %71 = vmatpush2.bf16.msra.mxu0 0
  %72 = vmatprep.subr.bf16.mxu0 0
  %73 = vmatpush2.bf16.msra.mxu0 0
  %74 = vmatprep.subr.bf16.mxu0 0
  %75 = vmatpush2.bf16.msra.mxu0 0
  %76 = vmatprep.subr.bf16.mxu0 0
  %77 = vmatpush2.bf16.msra.mxu0 0
  %78 = vmatprep.subr.bf16.mxu0 0
  %79 = vmatpush2.bf16.msra.mxu0 0
  %80 = vmatprep.subr.bf16.mxu0 0
  %81 = vmatpush2.bf16.msra.mxu0 0
  %82 = vmatprep.mubr.bf16.mxu0 0
  %83 = vmatmul.mubr.bf16.gmra.mxu0 %v48
  %v84 = vpop.f32.mrf.mxu0
  %v85 = vadd.f32 %v32, %v84
  %v86 = vpop.f32.mrf.mxu0
  %v87 = vpop.f32.mrf.mxu0
  %v88 = vpop.f32.mrf.mxu0
  %89 = vdwg.mxu0
  %v90 = vmax.f32 %v85, 0.0
  %v91 = vpack.c.bf16 %v90, %v90
  %v92 = vld [vmem:[%s3] sm:$0xf]
  %v93 = vld [vmem:[%s3 + $0x4] sm:$0xf]
  %v94 = vld [vmem:[%s3 + $0x8] sm:$0xf]
  %v95 = vld [vmem:[%s3 + $0xc] sm:$0xf]
  %v96 = vld [vmem:[%s3 + $0x10] sm:$0xf]
  %v97 = vld [vmem:[%s3 + $0x14] sm:$0xf]
  %v98 = vld [vmem:[%s3 + $0x18] sm:$0xf]
  %v99 = vld [vmem:[%s3 + $0x1c] sm:$0xf]
  %v100 = vld [vmem:[%s3 + $0x20] sm:$0xf]
  %v101 = vld [vmem:[%s3 + $0x24] sm:$0xf]
  %v102 = vld [vmem:[%s3 + $0x28] sm:$0xf]
  %v103 = vld [vmem:[%s3 + $0x2c] sm:$0xf]
  %v104 = vld [vmem:[%s3 + $0x30] sm:$0xf]
  %v105 = vld [vmem:[%s3 + $0x34] sm:$0xf]
  %v106 = vld [vmem:[%s3 + $0x38] sm:$0xf]
  %v107 = vld [vmem:[%s3 + $0x3c] sm:$0xf]
  %v108 = vld [vmem:[%s4] sm:$0x1]
  %v110 = vlaneseq
  %v111 = vshrl.u32 %v110, 7
  %v112 = vsub.s32 0, %v111
  %v113 = vrot.slane %v108, %v112
  %v131 = vunpack.c.l.b16 %v92
  %v132 = vunpack.c.l.b16 %v93
  %v133 = vunpack.c.l.b16 %v94
  %v134 = vunpack.c.l.b16 %v95
  %v135 = vunpack.c.l.b16 %v96
  %v136 = vunpack.c.l.b16 %v97
  %v137 = vunpack.c.l.b16 %v98
  %v138 = vunpack.c.l.b16 %v99
  %v139 = vunpack.c.l.b16 %v100
  %v140 = vunpack.c.l.b16 %v101
  %v141 = vunpack.c.l.b16 %v102
  %v142 = vunpack.c.l.b16 %v103
  %v143 = vunpack.c.l.b16 %v104
  %v144 = vunpack.c.l.b16 %v105
  %v145 = vunpack.c.l.b16 %v106
  %v146 = vunpack.c.l.b16 %v107
  %v147 = vpack.c.b16 %v132, %v131
  %v148 = vpack.c.b16 %v134, %v133
  %v149 = vpack.c.b16 %v136, %v135
  %v150 = vpack.c.b16 %v138, %v137
  %v151 = vpack.c.b16 %v140, %v139
  %v152 = vpack.c.b16 %v142, %v141
  %v153 = vpack.c.b16 %v144, %v143
  %v154 = vpack.c.b16 %v146, %v145
  %163 = vmatprep.subr.bf16.mxu0 0
  %164 = vmatpush1.bf16.msra.mxu0 %v154
  %165 = vmatprep.subr.bf16.mxu0 0
  %166 = vmatpush1.bf16.msra.mxu0 %v153
  %167 = vmatprep.subr.bf16.mxu0 0
  %168 = vmatpush1.bf16.msra.mxu0 %v152
  %169 = vmatprep.subr.bf16.mxu0 0
  %170 = vmatpush1.bf16.msra.mxu0 %v151
  %171 = vmatprep.subr.bf16.mxu0 0
  %172 = vmatpush1.bf16.msra.mxu0 %v150
  %173 = vmatprep.subr.bf16.mxu0 0
  %174 = vmatpush1.bf16.msra.mxu0 %v149
  %175 = vmatprep.subr.bf16.mxu0 0
  %176 = vmatpush1.bf16.msra.mxu0 %v148
  %177 = vmatprep.subr.bf16.mxu0 0
  %178 = vmatpush1.bf16.msra.mxu0 %v147
  %179 = vmatprep.subr.bf16.mxu0 0
  %180 = vmatpush2.bf16.msra.mxu0 0
  %181 = vmatprep.subr.bf16.mxu0 0
  %182 = vmatpush2.bf16.msra.mxu0 0
  %183 = vmatprep.subr.bf16.mxu0 0
  %184 = vmatpush2.bf16.msra.mxu0 0
  %185 = vmatprep.subr.bf16.mxu0 0
  %186 = vmatpush2.bf16.msra.mxu0 0
  %187 = vmatprep.subr.bf16.mxu0 0
  %188 = vmatpush2.bf16.msra.mxu0 0
  %189 = vmatprep.subr.bf16.mxu0 0
  %190 = vmatpush2.bf16.msra.mxu0 0
  %191 = vmatprep.subr.bf16.mxu0 0
  %192 = vmatpush2.bf16.msra.mxu0 0
  %193 = vmatprep.subr.bf16.mxu0 0
  %194 = vmatpush2.bf16.msra.mxu0 0
  %195 = vmatprep.mubr.bf16.mxu0 0
  %196 = vmatmul.mubr.bf16.gmra.mxu0 %v91
  %v197 = vpop.f32.mrf.mxu0
  %v198 = vadd.f32 %v113, %v197
  %v199 = vpop.f32.mrf.mxu0
  %v200 = vpop.f32.mrf.mxu0
  %v201 = vpop.f32.mrf.mxu0
  %202 = vdwg.mxu0
  %v203 = vsub.f32 0.0, %v198
  %v204 = vmul.f32 %v203, 1.442695
  %v205 = vpow.pop %v204
  %v206 = vadd.f32 %v205, 1.0
  %v207 = vrcp.pop %v206
  %208 = vst [vmem:[%s5] sm:$0xff] %v207
  // Predicated region
  $region22: #{net_forward.1} parent=0 // pred_check
    _
  $region23: #{net_forward.1} parent=0 // pred_check_branch
    %210 = sbr.rel (0) target = $region25
  $region24: #{net_forward.1} parent=0 // pred_region
    _
  $region25: #{net_forward.1} parent=0 // pred_fallthru
    _
  // Predicated region
  $region26: #{net_forward.1} parent=0 // pred_check
    _
  $region27: #{net_forward.1} parent=0 // pred_check_branch
    %212 = sbr.rel (0) target = $region29
  $region28: #{net_forward.1} parent=0 // pred_region
    _
  $region29: #{net_forward.1} parent=0 // pred_fallthru
    _

</llo_original>
